<compile_context>
chip_gen: v7x
topology: tpu7x:2x2x1
jax: 0.10.0
libtpu: 0.0.40
codegen_flags: <defaults>
</compile_context>

<pallas_src>
import functools

import jax
import jax.numpy as jnp
from jax.experimental import pallas as pl
from jax.experimental.pallas import tpu as pltpu


# ----------------------------------------------------------------------------
# small helpers
# ----------------------------------------------------------------------------
def _layer_norm(x, g, b, eps=1e-5):
    mu = jnp.mean(x, axis=-1, keepdims=True)
    var = jnp.mean((x - mu) ** 2, axis=-1, keepdims=True)
    return (x - mu) * jax.lax.rsqrt(var + eps) * g + b


def _erf_poly(x):
    # Abramowitz & Stegun 7.1.26, |err| <= 1.5e-7 (matches erf to f32 precision).
    # The dependent divide is routed to the EUP via pl.reciprocal (approx error
    # ~1e-4, far inside the 2e-2 tolerance) -- frees the VPU in the MLP kernel.
    a1, a2, a3, a4, a5 = 0.254829592, -0.284496736, 1.421413741, -1.453152027, 1.061405429
    p = 0.3275911
    s = jnp.where(x >= 0.0, 1.0, -1.0)
    ax = jnp.abs(x)
    t = pl.reciprocal(1.0 + p * ax, approx=True)
    poly = ((((a5 * t + a4) * t + a3) * t + a2) * t + a1) * t
    return s * (1.0 - poly * jnp.exp(-ax * ax))


def _gelu_exact(x):
    # erf-based GELU (PyTorch nn.GELU() default semantics).
    return 0.5 * x * (1.0 + _erf_poly(x * 0.7071067811865476))


def _round_up(x, m):
    return ((x + m - 1) // m) * m


def _row_block(total, target=512, min_grid=1):
    """Largest legal row-block <= target that divides `total` (8-aligned or full).

    With min_grid=2 the block is additionally capped so the 1-D grid has >= 2
    steps when possible (keeps both v7x TensorCores busy; free on v5e/v6e).
    """
    cap = min(target, total)
    if min_grid > 1 and total >= 2 * 8:
        cap = min(cap, max(8, total // min_grid))
    b = cap
    while b > 1:
        if total % b == 0 and (b % 8 == 0 or b == total):
            return b
        b -= 1
    return total


@functools.lru_cache(maxsize=None)
def _vmem_limit_bytes():
    """Per-generation VMEM budget: ~96 MiB on 128 MiB parts (v5e/v6e), ~48 MiB on v7x."""
    try:
        phys = int(pltpu.get_tpu_info().vmem_capacity_bytes)
    except Exception:
        phys = 64 * 1024 * 1024
    return max(32 * 1024 * 1024, min(96 * 1024 * 1024, (phys * 3) // 4))


def _fold_ln_into_linear(p, scale=1.0):
    """LayerNorm affine (and optionally the softmax scale) folded into the Linear."""
    g, b, w, bias = p
    w_f = (scale * g[:, None] * w).astype(jnp.bfloat16)       # bf16 MXU operand
    bias_f = (scale * (bias + b @ w)).astype(jnp.float32)      # added to f32 accumulator
    return w_f, bias_f


# ----------------------------------------------------------------------------
# Kernel 1: fused (affine-free) LayerNorm + Linear  (to_q / to_k / to_v)
# ----------------------------------------------------------------------------
def _ln_linear_kernel(x_ref, w_ref, b_ref, o_ref):
    x = x_ref[...].astype(jnp.float32)
    mu = jnp.mean(x, axis=-1, keepdims=True)
    var = jnp.mean((x - mu) ** 2, axis=-1, keepdims=True)
    xn = (x - mu) * jax.lax.rsqrt(var + 1e-5)
    y = jnp.dot(xn.astype(w_ref.dtype), w_ref[...],
                preferred_element_type=jnp.float32) + b_ref[...]
    o_ref[...] = y.astype(o_ref.dtype)


def ln_linear(x, w, bias, *, target_rows=512):
    T, d = x.shape
    dout = w.shape[1]
    br = _row_block(T, target_rows, min_grid=2)
    return pl.pallas_call(
        _ln_linear_kernel,
        out_shape=jax.ShapeDtypeStruct((T, dout), jnp.bfloat16),
        grid_spec=pltpu.PrefetchScalarGridSpec(
            num_scalar_prefetch=0,
            grid=(T // br,),
            in_specs=[
                pl.BlockSpec((br, d), lambda i: (i, 0)),
                pl.BlockSpec((d, dout), lambda i: (0, 0)),
                pl.BlockSpec((1, dout), lambda i: (0, 0)),
            ],
            out_specs=pl.BlockSpec((br, dout), lambda i: (i, 0)),
        ),
        compiler_params=pltpu.CompilerParams(
            dimension_semantics=("parallel",),
            vmem_limit_bytes=_vmem_limit_bytes(),
        ),
    )(x, w, bias.reshape(1, -1))


# ----------------------------------------------------------------------------
# Kernel 2: multi-camera cross attention.
#   Grid: (B, Q-blocks, cameras).  The camera axis is the online-softmax
#   ("arbitrary") reduction axis.  Inputs are token-major, head-merged (…, md)
#   tiles (no XLA head-split transposes); heads are handled in-kernel via static
#   lane slices and dh-with-dh contractions.  Output is head-merged and padded
#   to a lane-dense width (multiple of 128).
# ----------------------------------------------------------------------------
def _attention_kernel(q_ref, k_ref, v_ref, o_ref, m_sc, l_sc, acc_sc,
                      *, heads, dim_head, out_pad):
    # q_ref : (1, 1, blk_q, md) bf16   (queries of camera c, scale folded into to_q)
    # k_ref : (1, 1, K,    md) bf16
    # v_ref : (1, 1, K,    md) bf16
    # o_ref : (1, blk_q, md_out) bf16  (head-merged, zero-padded to >=128 lanes)
    c = pl.program_id(2)
    dh = dim_head

    @pl.when(c == 0)
    def _init():
        m_sc[...] = jnp.full(m_sc.shape, -jnp.inf, m_sc.dtype)
        l_sc[...] = jnp.zeros(l_sc.shape, l_sc.dtype)
        acc_sc[...] = jnp.zeros(acc_sc.shape, acc_sc.dtype)

    q = q_ref[0, 0]                                        # (blk_q, md)
    k = k_ref[0, 0]                                        # (K, md)
    v = v_ref[0, 0]                                        # (K, md)

    for h in range(heads):
        sl = slice(h * dh, (h + 1) * dh)
        # logits (blk_q, K): contract dh-with-dh (scale already folded into q)
        s = jax.lax.dot_general(q[:, sl], k[:, sl],
                                (((1,), (1,)), ((), ())),
                                preferred_element_type=jnp.float32)
        m_prev = m_sc[h]                                   # (blk_q, 1)
        m_new = jnp.maximum(m_prev, s.max(axis=-1, keepdims=True))
        alpha = jnp.exp(m_prev - m_new)
        p = jnp.exp(s - m_new)                             # f32 softmax math
        l_sc[h] = alpha * l_sc[h] + p.sum(axis=-1, keepdims=True)
        pv = jnp.dot(p.astype(v.dtype), v[:, sl],
                     preferred_element_type=jnp.float32)   # (blk_q, dh)
        acc_sc[h] = alpha * acc_sc[h] + pv
        m_sc[h] = m_new

    @pl.when(c == pl.num_programs(2) - 1)
    def _finalize():
        outs = [acc_sc[h] * pl.reciprocal(l_sc[h], approx=True) for h in range(heads)]
        if out_pad:
            outs.append(jnp.zeros((acc_sc.shape[1], out_pad), jnp.float32))
        o_ref[0] = jnp.concatenate(outs, axis=-1).astype(o_ref.dtype)


def _attention_vmem_ok(blk_q, K, md, md_out, heads, dh, limit):
    lane = 128
    md_l = _round_up(md, lane)
    q_b = 2 * blk_q * md_l * 2                      # double-buffered q tile (bf16)
    kv_b = 2 * 2 * K * md_l * 2                     # double-buffered k + v tiles
    o_b = 2 * blk_q * _round_up(md_out, lane) * 2   # double-buffered output slab
    sc_b = heads * blk_q * (2 * lane + _round_up(dh, lane)) * 4   # m/l/acc f32 scratch
    return (q_b + kv_b + o_b + sc_b) * 2 < limit    # 2x safety margin for layout padding


def attention(qp, kp, vp, *, heads, dim_head):
    # qp: (B, n, Q, md) bf16 ; kp/vp: (B, n, K, md) bf16 (token-major, head-merged)
    B, n, Q, md = qp.shape
    K = kp.shape[2]
    dh = dim_head
    md_out = _round_up(md, 128)            # lane-dense output width
    out_pad = md_out - md
    vmem_limit = _vmem_limit_bytes()

    # Prefer a single Q block per (batch, camera) so each K/V tile is DMA'd exactly once.
    if _attention_vmem_ok(Q, K, md, md_out, heads, dh, vmem_limit):
        blk_q = Q
    else:
        # TODO(synk): if this fallback triggers, restructure so the Q axis is innermost
        # and m/l/acc scratch covers all Q blocks, avoiding per-Q-block K/V refetch.
        blk_q = _row_block(Q, 256)
    if B == 1 and Q // blk_q < 2:
        # v7x has 2 TensorCores: trade one K/V refetch for a >=2-step parallel grid.
        blk_q = _row_block(Q, max(8, Q // 2))

    kernel = functools.partial(_attention_kernel, heads=heads, dim_head=dh, out_pad=out_pad)
    return pl.pallas_call(
        kernel,
        out_shape=jax.ShapeDtypeStruct((B, Q, md_out), jnp.bfloat16),
        grid_spec=pltpu.PrefetchScalarGridSpec(
            num_scalar_prefetch=0,
            grid=(B, Q // blk_q, n),
            in_specs=[
                pl.BlockSpec((1, 1, blk_q, md), lambda b, qi, c: (b, c, qi, 0)),
                pl.BlockSpec((1, 1, K, md), lambda b, qi, c: (b, c, 0, 0)),
                pl.BlockSpec((1, 1, K, md), lambda b, qi, c: (b, c, 0, 0)),
            ],
            out_specs=pl.BlockSpec((1, blk_q, md_out), lambda b, qi, c: (b, qi, 0)),
            scratch_shapes=[
                pltpu.VMEM((heads, blk_q, 1), jnp.float32),   # running max
                pltpu.VMEM((heads, blk_q, 1), jnp.float32),   # running denom
                pltpu.VMEM((heads, blk_q, dh), jnp.float32),  # running accumulator
            ],
        ),
        compiler_params=pltpu.CompilerParams(
            dimension_semantics=("parallel", "parallel", "arbitrary"),
            vmem_limit_bytes=vmem_limit,
        ),
    )(qp, kp, vp)


# ----------------------------------------------------------------------------
# Kernel 3: fused output path:
#   proj Linear + skip add + prenorm LN + MLP(Linear,GELU,Linear) residual + postnorm LN
# ----------------------------------------------------------------------------
def _out_block_kernel(a_ref, skip_ref, wp_ref, bp_ref, g1_ref, b1_ref,
                      w1_ref, bm1_ref, w2_ref, bm2_ref, g2_ref, b2_ref, o_ref):
    z = jnp.dot(a_ref[...], wp_ref[...], preferred_element_type=jnp.float32) + bp_ref[...]
    z = z + skip_ref[...].astype(jnp.float32)
    z = _layer_norm(z, g1_ref[...], b1_ref[...])
    h = jnp.dot(z.astype(w1_ref.dtype), w1_ref[...],
                preferred_element_type=jnp.float32) + bm1_ref[...]
    h = _gelu_exact(h)
    z = z + jnp.dot(h.astype(w2_ref.dtype), w2_ref[...],
                    preferred_element_type=jnp.float32) + bm2_ref[...]
    z = _layer_norm(z, g2_ref[...], b2_ref[...])
    o_ref[...] = z.astype(o_ref.dtype)


def out_block(a, skip_tok, params, *, target_rows=512):
    T, md_out = a.shape
    d = skip_tok.shape[1]
    wp, bp = params["proj"]
    if wp.shape[0] < md_out:
        # attention output was zero-padded to a lane-dense width; pad proj rows with
        # zeros so the matmul stays exact.
        wp = jnp.pad(wp, ((0, md_out - wp.shape[0]), (0, 0)))
    g1, b1 = params["prenorm"]
    w1, bm1 = params["mlp1"]
    w2, bm2 = params["mlp2"]
    g2, b2 = params["postnorm"]
    d2 = w1.shape[1]
    br = _row_block(T, target_rows, min_grid=2)

    def full(shape):
        return pl.BlockSpec(shape, lambda i, _n=len(shape): (0,) * _n)

    return pl.pallas_call(
        _out_block_kernel,
        out_shape=jax.ShapeDtypeStruct((T, d), jnp.float32),
        grid_spec=pltpu.PrefetchScalarGridSpec(
            num_scalar_prefetch=0,
            grid=(T // br,),
            in_specs=[
                pl.BlockSpec((br, md_out), lambda i: (i, 0)),
                pl.BlockSpec((br, d), lambda i: (i, 0)),
                full((md_out, d)), full((1, d)),
                full((1, d)), full((1, d)),
                full((d, d2)), full((1, d2)),
                full((d2, d)), full((1, d)),
                full((1, d)), full((1, d)),
            ],
            out_specs=pl.BlockSpec((br, d), lambda i: (i, 0)),
        ),
        compiler_params=pltpu.CompilerParams(
            dimension_semantics=("parallel",),
            vmem_limit_bytes=_vmem_limit_bytes(),
        ),
    )(a, skip_tok,
      wp.astype(jnp.bfloat16), bp.reshape(1, -1),
      g1.reshape(1, -1), b1.reshape(1, -1),
      w1.astype(jnp.bfloat16), bm1.reshape(1, -1),
      w2.astype(jnp.bfloat16), bm2.reshape(1, -1),
      g2.reshape(1, -1), b2.reshape(1, -1))


# ----------------------------------------------------------------------------
# Full forward (glue is plain JAX reshapes; compute is in kernels)
# ----------------------------------------------------------------------------
def cross_attention_forward(q, k, v, skip, params, *, heads, dim_head):
    B, n, d, H, W = q.shape
    h_sp, w_sp = k.shape[3], k.shape[4]
    Q, K = H * W, h_sp * w_sp
    md = heads * dim_head
    scale = dim_head ** (-0.5)

    # Fold LN affine (and the softmax scale for to_q) into the projection weights
    # -- zero-runtime, exact preprocessing.
    wq_f, bq_f = _fold_ln_into_linear(params["to_q"], scale=scale)
    wk_f, bk_f = _fold_ln_into_linear(params["to_k"])
    wv_f, bv_f = _fold_ln_into_linear(params["to_v"])

    # Token-major layouts for the LN+Linear projections (required by the module's
    # channel-first input layout; everything downstream is metadata-only reshapes).
    q_tok = q.transpose(0, 1, 3, 4, 2).reshape(B * n * Q, d)
    k_tok = k.transpose(0, 1, 3, 4, 2).reshape(B * n * K, d)
    v_tok = v.transpose(0, 1, 3, 4, 2).reshape(B * n * K, d)

    # Head-merged, token-major projections; the reshapes below are contiguous
    # (no HBM copies) -- the old qh/kth/vh head-split transposes are gone.
    qp = ln_linear(q_tok, wq_f, bq_f).reshape(B, n, Q, md)   # bf16
    kp = ln_linear(k_tok, wk_f, bk_f).reshape(B, n, K, md)   # bf16
    vp = ln_linear(v_tok, wv_f, bv_f).reshape(B, n, K, md)   # bf16

    a = attention(qp, kp, vp, heads=heads, dim_head=dim_head)   # (B, Q, md_out) bf16

    skip_tok = skip.transpose(0, 2, 3, 1).reshape(B * Q, d)
    md_out = a.shape[-1]
    z = out_block(a.reshape(B * Q, md_out), skip_tok, params)   # (B*Q, d) f32
    return z.reshape(B, Q, d).transpose(0, 2, 1).reshape(B, d, H, W)


# ----------------------------------------------------------------------------
# Deterministic parameter init (shapes match CrossAttention.__init__)
# ----------------------------------------------------------------------------
def init_params(key, dim, heads, dim_head):
    md = heads * dim_head

    def lin(k, din, dout, scale=0.1):
        k1, k2 = jax.random.split(k)
        return (scale * jax.random.normal(k1, (din, dout), jnp.float32),
                scale * jax.random.normal(k2, (dout,), jnp.float32))

    def ln(k, d):
        k1, k2 = jax.random.split(k)
        return (1.0 + 0.1 * jax.random.normal(k1, (d,), jnp.float32),
                0.1 * jax.random.normal(k2, (d,), jnp.float32))

    ks = jax.random.split(key, 11)
    params = {}
    for i, name in enumerate(["to_q", "to_k", "to_v"]):
        g, b = ln(ks[i], dim)
        w, bias = lin(ks[3 + i], dim, md)
        params[name] = (g, b, w, bias)   # qkv_bias=True
    params["proj"] = lin(ks[6], md, dim)
    params["prenorm"] = ln(ks[7], dim)
    params["mlp1"] = lin(ks[8], dim, 2 * dim)
    params["mlp2"] = lin(ks[9], 2 * dim, dim)
    params["postnorm"] = ln(ks[10], dim)
    return params


# ----------------------------------------------------------------------------
# Pure-JAX reference (mirrors the PyTorch forward) for correctness checking
# ----------------------------------------------------------------------------
def reference(q, k, v, skip, params, *, heads, dim_head):
    B, n, d, H, W = q.shape
    h, w = k.shape[3], k.shape[4]
    Q, K = H * W, h * w
    scale = dim_head ** (-0.5)
    hp = jax.lax.Precision.HIGHEST

    def ln(x, g, b):
        mu = x.mean(-1, keepdims=True)
        var = ((x - mu) ** 2).mean(-1, keepdims=True)
        return (x - mu) / jnp.sqrt(var + 1e-5) * g + b

    def ln_lin(x, p):
        g, bb, wgt, bias = p
        return jnp.dot(ln(x, g, bb), wgt, precision=hp) + bias

    qt = q.transpose(0, 1, 3, 4, 2).reshape(B, n, Q, d)
    kt = k.transpose(0, 1, 3, 4, 2).reshape(B, n, K, d)
    vt = v.transpose(0, 1, 3, 4, 2).reshape(B, n, K, d)

    qp = ln_lin(qt, params["to_q"])
    kp = ln_lin(kt, params["to_k"])
    vp = ln_lin(vt, params["to_v"])

    m, dh = heads, dim_head
    qh = qp.reshape(B, n, Q, m, dh).transpose(0, 3, 1, 2, 4).reshape(B * m, n, Q, dh)
    kh = kp.reshape(B, n, K, m, dh).transpose(0, 3, 1, 2, 4).reshape(B * m, n, K, dh)
    vh = vp.reshape(B, n, K, m, dh).transpose(0, 3, 1, 2, 4).reshape(B * m, n * K, dh)

    dot = scale * jnp.einsum("bnqd,bnkd->bnqk", qh, kh, precision=hp)
    dot = dot.transpose(0, 2, 1, 3).reshape(B * m, Q, n * K)
    att = jax.nn.softmax(dot, axis=-1)
    a = jnp.einsum("bqk,bkd->bqd", att, vh, precision=hp)
    a = a.reshape(B, m, Q, dh).transpose(0, 2, 1, 3).reshape(B, Q, m * dh)

    wp, bp = params["proj"]
    z = jnp.dot(a, wp, precision=hp) + bp
    z = z + skip.transpose(0, 2, 3, 1).reshape(B, Q, d)
    z = ln(z, *params["prenorm"])
    w1, bm1 = params["mlp1"]
    w2, bm2 = params["mlp2"]
    hdn = jax.nn.gelu(jnp.dot(z, w1, precision=hp) + bm1, approximate=False)
    z = z + jnp.dot(hdn, w2, precision=hp) + bm2
    z = ln(z, *params["postnorm"])
    return z.transpose(0, 2, 1).reshape(B, d, H, W)


# ----------------------------------------------------------------------------
if __name__ == "__main__":
    B, n_cams, dim = 2, 2, 32
    H = W = 8          # query spatial
    h = w = 8          # key/value spatial
    heads, dim_head = 4, 16

    key = jax.random.PRNGKey(0)
    kq, kk, kv, ksk, kp = jax.random.split(key, 5)
    q = jax.random.normal(kq, (B, n_cams, dim, H, W), jnp.float32)
    k = jax.random.normal(kk, (B, n_cams, dim, h, w), jnp.float32)
    v = jax.random.normal(kv, (B, n_cams, dim, h, w), jnp.float32)
    skip = jax.random.normal(ksk, (B, dim, H, W), jnp.float32)
    params = init_params(kp, dim, heads, dim_head)

    out = cross_attention_forward(q, k, v, skip, params, heads=heads, dim_head=dim_head)
    out = jax.block_until_ready(out)

    ref = reference(q, k, v, skip, params, heads=heads, dim_head=dim_head)
    assert out.shape == (B, dim, H, W), out.shape
    max_err = float(jnp.max(jnp.abs(out - ref)))
    # bf16 MXU operands -> 2e-2 tolerance vs f32 HIGHEST reference.
    if not bool(jnp.allclose(out, ref, atol=2e-2, rtol=2e-2)):
        raise AssertionError(f"kernel/reference mismatch, max abs err = {max_err}")

    print("KERNEL_OK")
</pallas_src>

<mosaic_0001>
module attributes {stable_mosaic.version = 11 : i64} {
  func.func @_ln_linear_kernel(%arg0: i32, %arg1: memref<128x32xf32, #tpu.memory_space<vmem>>, %arg2: memref<32x64xbf16, #tpu.memory_space<vmem>>, %arg3: memref<1x64xf32, #tpu.memory_space<vmem>>, %arg4: memref<128x64xbf16, #tpu.memory_space<vmem>>) attributes {dimension_semantics = [#tpu.dimension_semantics<parallel>], iteration_bounds = array<i64: 2>, scalar_prefetch = 0 : i64, scratch_operands = 0 : i64, tpu.core_type = #tpu.core_type<tc>, window_params = [{transform_indices = @transform_0, window_bounds = array<i64: 128, 32>}, {pipeline_mode = #tpu.pipeline_mode<synchronous>, transform_indices = @transform_1, window_bounds = array<i64: 32, 64>}, {pipeline_mode = #tpu.pipeline_mode<synchronous>, transform_indices = @transform_2, window_bounds = array<i64: 1, 64>}, {transform_indices = @transform_3, window_bounds = array<i64: 128, 64>}]} {
    %c0 = arith.constant 0 : index
    %c0_0 = arith.constant 0 : index
    %0 = vector.load %arg1[%c0, %c0_0] : memref<128x32xf32, #tpu.memory_space<vmem>>, vector<128x32xf32>
    %cst = arith.constant dense<0.000000e+00> : vector<128xf32>
    %1 = vector.multi_reduction <add>, %0, %cst [1] : vector<128x32xf32> to vector<128xf32>
    %2 = vector.shape_cast %1 : vector<128xf32> to vector<128x1xf32>
    %cst_1 = arith.constant 3.200000e+01 : f32
    %3 = vector.broadcast %cst_1 : f32 to vector<128x1xf32>
    %4 = arith.divf %2, %3 : vector<128x1xf32>
    %5 = vector.broadcast %4 : vector<128x1xf32> to vector<128x32xf32>
    %6 = arith.subf %0, %5 : vector<128x32xf32>
    %7 = arith.mulf %6, %6 : vector<128x32xf32>
    %cst_2 = arith.constant dense<0.000000e+00> : vector<128xf32>
    %8 = vector.multi_reduction <add>, %7, %cst_2 [1] : vector<128x32xf32> to vector<128xf32>
    %9 = vector.shape_cast %8 : vector<128xf32> to vector<128x1xf32>
    %cst_3 = arith.constant 3.200000e+01 : f32
    %10 = vector.broadcast %cst_3 : f32 to vector<128x1xf32>
    %11 = arith.divf %9, %10 : vector<128x1xf32>
    %12 = vector.broadcast %4 : vector<128x1xf32> to vector<128x32xf32>
    %13 = arith.subf %0, %12 : vector<128x32xf32>
    %cst_4 = arith.constant 9.99999974E-6 : f32
    %14 = vector.broadcast %cst_4 : f32 to vector<128x1xf32>
    %15 = arith.addf %11, %14 : vector<128x1xf32>
    %16 = math.rsqrt %15 : vector<128x1xf32>
    %17 = vector.broadcast %16 : vector<128x1xf32> to vector<128x32xf32>
    %18 = arith.mulf %13, %17 : vector<128x32xf32>
    %19 = arith.truncf %18 : vector<128x32xf32> to vector<128x32xbf16>
    %c0_5 = arith.constant 0 : index
    %c0_6 = arith.constant 0 : index
    %20 = vector.load %arg2[%c0_5, %c0_6] : memref<32x64xbf16, #tpu.memory_space<vmem>>, vector<32x64xbf16>
    %cst_7 = arith.constant dense<0.000000e+00> : vector<128x64xf32>
    %21 = tpu.matmul %19, %20, %cst_7 {dimension_numbers = #tpu.dot_dimension_numbers<[1], [0], [0], [1], [0, 0, 1, 1], [], []>} : vector<128x32xbf16>, vector<32x64xbf16>, vector<128x64xf32> -> vector<128x64xf32>
    %c0_8 = arith.constant 0 : index
    %c0_9 = arith.constant 0 : index
    %22 = vector.load %arg3[%c0_8, %c0_9] : memref<1x64xf32, #tpu.memory_space<vmem>>, vector<1x64xf32>
    %23 = vector.broadcast %22 : vector<1x64xf32> to vector<128x64xf32>
    %24 = arith.addf %21, %23 : vector<128x64xf32>
    %25 = arith.truncf %24 : vector<128x64xf32> to vector<128x64xbf16>
    %c0_10 = arith.constant 0 : index
    %c0_11 = arith.constant 0 : index
    %26 = vector.load %arg4[%c0_10, %c0_11] : memref<128x64xbf16, #tpu.memory_space<vmem>>, vector<128x64xbf16>
    tpu.vector_store %arg4[%c0_10, %c0_11], %25 {strides = array<i32>} : memref<128x64xbf16, #tpu.memory_space<vmem>>, vector<128x64xbf16>,
    return
  }
  func.func @transform_0(%arg0: i32) -> (i32, i32) {
    %c0_i32 = arith.constant 0 : i32
    %c0_i32_0 = arith.constant 0 : i32
    return %arg0, %c0_i32 : i32, i32
  }
  func.func @transform_1(%arg0: i32) -> (i32, i32) {
    %c0_i32 = arith.constant 0 : i32
    %c0_i32_0 = arith.constant 0 : i32
    %c0_i32_1 = arith.constant 0 : i32
    return %c0_i32, %c0_i32_0 : i32, i32
  }
  func.func @transform_2(%arg0: i32) -> (i32, i32) {
    %c0_i32 = arith.constant 0 : i32
    %c0_i32_0 = arith.constant 0 : i32
    %c0_i32_1 = arith.constant 0 : i32
    return %c0_i32, %c0_i32_0 : i32, i32
  }
  func.func @transform_3(%arg0: i32) -> (i32, i32) {
    %c0_i32 = arith.constant 0 : i32
    %c0_i32_0 = arith.constant 0 : i32
    return %arg0, %c0_i32 : i32, i32
  }
}

</mosaic_0001>

<llo_original>
// kernel: tpu_custom_call.1
$region0: #{tpu_custom_call.1}
  #allocation0 [shape = 'u32[]', space=smem, size = 0x4, offset = 0x4, fixed_abs, tag = 'smem constant byte address 0x4 - core index']
  #allocation1 [shape = 'u32[144,128]{1,0:T(1,128)}', space=vmem, size = 0x12000, scoped, tag = 'internal scratch']
  %s0 = inlined_call_operand.vmem [shape: f32[256,32], index: 0, kind: input, shape index: {}]
  %s1 = inlined_call_operand.vmem [shape: bf16[32,64], index: 1, kind: input, shape index: {}]
  %s2 = inlined_call_operand.vmem [shape: f32[1,64], index: 2, kind: input, shape index: {}]
  %s3 = inlined_call_operand.vmem [shape: bf16[256,64], index: 3, kind: output, shape index: {}]
  %s4 = sld [smem:[#allocation0]]
  $region45: #{tpu_custom_call.1} parent=0
    _
  %s6 = ssub.s32 1, %s4
  %s7 = scalar_select 0, %s6, %s4
  loop: start=0, step=1, limit=4
  $region2: #{tpu_custom_call.1} parent=0 // loop_pre_header
    _
  $region3: #{tpu_custom_call.1} parent=0 // loop_header
    %s9 = sphi 0, %s13
    %p10 = scmp.ge.s32.totalorder %s9, 4
    %s19 = sphi 0, %s21
    %s22 = sphi 0, %s19
    %s23 = sphi 0, %s22
    %s39 = sphi 0, %s23
    %s43 = sphi 0, %s43
    %s45 = sphi 0, %s43
    %s46 = sphi 0, %s45
    %s60 = sphi 0, %s46
    %s64 = sphi 0, %s64
    %s66 = sphi 0, %s64
    %s67 = sphi 0, %s66
    %s81 = sphi 0, %s67
    %s87 = sphi 0, %s89
    %s90 = sphi 0, %s87
    %s91 = sphi 0, %s90
    %s107 = sphi 0, %s91
  $region4: #{tpu_custom_call.1} parent=0 // loop_header_branch
    %12 = sbr.rel (%p10) target = $region8
  $region5: #{tpu_custom_call.1} parent=0 // loop_body
    %s14 = ssub.s32 %s9, 1
    %s15 = ssub.s32 %s9, 2
    %s16 = sadd.s32 %s9, 1
    %s17 = ssub.s32 %s9, %s16
    %p18 = scmp.eq.s32.totalorder %s17, 0
    %s20 = sadd.s32 %s19, 1
    %s21 = scalar_select %p18, %s19, %s20
    %p24 = pneg %p18
    %p25 = scmp.eq.s32.totalorder %s9, 1
    %p26 = por %p24, %p25
    %p27 = scmp.ne.s32.totalorder %s19, %s22
    %p28 = scmp.eq.s32.totalorder %s9, 0
    %p29 = por %p27, %p28
    %p30 = scmp.ne.s32.totalorder %s19, %s22
    %p31 = scmp.eq.s32.totalorder %s14, 1
    %p32 = por %p30, %p31
    %p33 = scmp.ne.s32.totalorder %s22, %s23
    %p34 = scmp.eq.s32.totalorder %s14, 0
    %p35 = por %p33, %p34
    %p36 = scmp.ne.s32.totalorder %s22, %s23
    %p37 = scmp.eq.s32.totalorder %s15, 1
    %p38 = por %p36, %p37
    %p40 = scmp.ne.s32.totalorder %s23, %s39
    %p41 = scmp.eq.s32.totalorder %s15, 0
    %p42 = por %p40, %p41
    %s44 = sadd.s32 %s43, 1
    %p47 = scmp.eq.s32.totalorder %s9, 1
    %p48 = scmp.ne.s32.totalorder %s43, %s45
    %p49 = scmp.eq.s32.totalorder %s9, 0
    %p50 = por %p48, %p49
    %p51 = scmp.ne.s32.totalorder %s43, %s45
    %p52 = scmp.eq.s32.totalorder %s14, 1
    %p53 = por %p51, %p52
    %p54 = scmp.ne.s32.totalorder %s45, %s46
    %p55 = scmp.eq.s32.totalorder %s14, 0
    %p56 = por %p54, %p55
    %p57 = scmp.ne.s32.totalorder %s45, %s46
    %p58 = scmp.eq.s32.totalorder %s15, 1
    %p59 = por %p57, %p58
    %p61 = scmp.ne.s32.totalorder %s46, %s60
    %p62 = scmp.eq.s32.totalorder %s15, 0
    %p63 = por %p61, %p62
    %s65 = sadd.s32 %s64, 1
    %p68 = scmp.eq.s32.totalorder %s9, 1
    %p69 = scmp.ne.s32.totalorder %s64, %s66
    %p70 = scmp.eq.s32.totalorder %s9, 0
    %p71 = por %p69, %p70
    %p72 = scmp.ne.s32.totalorder %s64, %s66
    %p73 = scmp.eq.s32.totalorder %s14, 1
    %p74 = por %p72, %p73
    %p75 = scmp.ne.s32.totalorder %s66, %s67
    %p76 = scmp.eq.s32.totalorder %s14, 0
    %p77 = por %p75, %p76
    %p78 = scmp.ne.s32.totalorder %s66, %s67
    %p79 = scmp.eq.s32.totalorder %s15, 1
    %p80 = por %p78, %p79
    %p82 = scmp.ne.s32.totalorder %s67, %s81
    %p83 = scmp.eq.s32.totalorder %s15, 0
    %p84 = por %p82, %p83
    %s85 = ssub.s32 %s9, %s16
    %p86 = scmp.eq.s32.totalorder %s85, 0
    %s88 = sadd.s32 %s87, 1
    %s89 = scalar_select %p86, %s87, %s88
    %p92 = pneg %p86
    %p93 = scmp.eq.s32.totalorder %s9, 1
    %p94 = por %p92, %p93
    %p95 = scmp.ne.s32.totalorder %s87, %s90
    %p96 = scmp.eq.s32.totalorder %s9, 0
    %p97 = por %p95, %p96
    %p98 = scmp.ne.s32.totalorder %s87, %s90
    %p99 = scmp.eq.s32.totalorder %s14, 1
    %p100 = por %p98, %p99
    %p101 = scmp.ne.s32.totalorder %s90, %s91
    %p102 = scmp.eq.s32.totalorder %s14, 0
    %p103 = por %p101, %p102
    %p104 = scmp.ne.s32.totalorder %s90, %s91
    %p105 = scmp.eq.s32.totalorder %s15, 1
    %p106 = por %p104, %p105
    %p108 = scmp.ne.s32.totalorder %s91, %s107
    %p109 = scmp.eq.s32.totalorder %s15, 0
    %p110 = por %p108, %p109
    %p111 = scmp.le.s32.totalorder 1, %s9
    %p112 = scmp.lt.s32.totalorder %s9, 3
    %p113 = pnand %p111, %p112
    %p114 = pneg %p113
    // Predicated region
    $region9: #{tpu_custom_call.1} parent=5 // pred_check
      _
    $region10: #{tpu_custom_call.1} parent=5 // pred_check_branch
      %116 = sbr.rel (%p113) target = $region12
    $region11: #{tpu_custom_call.1} parent=5 // pred_region
      %s117 = ssub.s32 %s9, 1
      // Predicated region
      $region13: #{tpu_custom_call.1} parent=11 // pred_check
        %p118 = pneg %p56
      $region14: #{tpu_custom_call.1} parent=11 // pred_check_branch
        %120 = sbr.rel (%p118) target = $region16
      $region15: #{tpu_custom_call.1} parent=11 // pred_region
        _
      $region16: #{tpu_custom_call.1} parent=11 // pred_fallthru
        _
      // Predicated region
      $region17: #{tpu_custom_call.1} parent=11 // pred_check
        %p121 = pneg %p77
      $region18: #{tpu_custom_call.1} parent=11 // pred_check_branch
        %123 = sbr.rel (%p121) target = $region20
      $region19: #{tpu_custom_call.1} parent=11 // pred_region
        _
      $region20: #{tpu_custom_call.1} parent=11 // pred_fallthru
        _
    $region12: #{tpu_custom_call.1} parent=5 // pred_fallthru
      _
    %p124 = scmp.lt.s32.totalorder %s9, 2
    // Predicated region
    $region21: #{tpu_custom_call.1} parent=5 // pred_check
      %p125 = pneg %p124
    $region22: #{tpu_custom_call.1} parent=5 // pred_check_branch
      %127 = sbr.rel (%p125) target = $region24
    $region23: #{tpu_custom_call.1} parent=5 // pred_region
      // Predicated region
      $region25: #{tpu_custom_call.1} parent=23 // pred_check
        %p128 = pneg %p29
      $region26: #{tpu_custom_call.1} parent=23 // pred_check_branch
        %130 = sbr.rel (%p128) target = $region28
      $region27: #{tpu_custom_call.1} parent=23 // pred_region
        %s131 = smul.u32 16, %s9
        %p132 = scmp.lt.s32.totalorder %s131, 31
        %s133 = scalar_select %p132, %s131, 31
        %s134 = smul.addr %s133, 8
        %s135 = scalar_lea.vmem %s0, %s134
        %s136 = smul.u32 16, %s9
      $region28: #{tpu_custom_call.1} parent=23 // pred_fallthru
        _
    $region24: #{tpu_custom_call.1} parent=5 // pred_fallthru
      _
    %p137 = scmp.le.s32.totalorder 1, %s9
    %p138 = scmp.lt.s32.totalorder %s9, 3
    %p139 = pnand %p137, %p138
    %p140 = pneg %p139
    // Predicated region
    $region29: #{tpu_custom_call.1} parent=5 // pred_check
      _
    $region30: #{tpu_custom_call.1} parent=5 // pred_check_branch
      %142 = sbr.rel (%p139) target = $region32
    $region31: #{tpu_custom_call.1} parent=5 // pred_region
      %s143 = ssub.s32 %s9, 1
      %s144 = smul.u32 16, %s14
      %p145 = scmp.lt.s32.totalorder %s144, 31
      %s146 = scalar_select %p145, %s144, 31
      %s147 = smul.addr %s146, 8
      %s148 = scalar_lea.vmem %s0, %s147
      %p149 = pneg %p35
      %p150 = pneg %p32
      %p151 = pneg %p56
      %p152 = pneg %p53
      %p153 = pneg %p77
      %p154 = pneg %p74
      %p155 = pneg %p103
      %p156 = pneg %p100
      %s157 = smul.u32 16, %s14
      %p158 = scmp.lt.s32.totalorder %s157, 31
      %s159 = scalar_select %p158, %s157, 31
      %s160 = smul.addr %s159, 4
      %s161 = scalar_lea.vmem %s3, %s160
      %s162 = smul.u32 16, %s14
      %p163 = scmp.lt.s32.totalorder %s162, 31
      %s164 = scalar_select %p163, %s162, 31
      %s165 = smul.addr %s164, 8
      %s166 = scalar_lea.vmem %s0, %s165
      %s167 = smul.u32 16, %s14
      %s168 = smul.u32 16, %s14
      %p169 = scmp.lt.s32.totalorder %s168, 31
      %s170 = scalar_select %p169, %s168, 31
      %s171 = smul.addr %s170, 4
      %s172 = scalar_lea.vmem %s3, %s171
      %s173 = smul.u32 16, %s14
      %v175 = vld [vmem:[%s166] sm:$0xff]
      %v176 = vld [vmem:[%s166 + $0x8] sm:$0xff]
      %v177 = vld [vmem:[%s166 + $0x10] sm:$0xff]
      %v178 = vld [vmem:[%s166 + $0x18] sm:$0xff]
      %v179 = vld [vmem:[%s166 + $0x20] sm:$0xff]
      %v180 = vld [vmem:[%s166 + $0x28] sm:$0xff]
      %v181 = vld [vmem:[%s166 + $0x30] sm:$0xff]
      %v182 = vld [vmem:[%s166 + $0x38] sm:$0xff]
      %v183 = vld [vmem:[%s166 + $0x40] sm:$0xff]
      %v184 = vld [vmem:[%s166 + $0x48] sm:$0xff]
      %v185 = vld [vmem:[%s166 + $0x50] sm:$0xff]
      %v186 = vld [vmem:[%s166 + $0x58] sm:$0xff]
      %v187 = vld [vmem:[%s166 + $0x60] sm:$0xff]
      %v188 = vld [vmem:[%s166 + $0x68] sm:$0xff]
      %v189 = vld [vmem:[%s166 + $0x70] sm:$0xff]
      %v190 = vld [vmem:[%s166 + $0x78] sm:$0xff]
      %vm191 = vcmask 261120
      %v192 = vsel %vm191, %v175, 0.0
      %193 = vadd.xlane.f32.xlu0 %v192
      %v194 = vpop.xlane.xlu0 %193
      %v195 = vsel %vm191, %v176, 0.0
      %196 = vadd.xlane.f32.xlu0 %v195
      %v197 = vpop.xlane.xlu0 %196
      %v198 = vsel %vm191, %v177, 0.0
      %199 = vadd.xlane.f32.xlu0 %v198
      %v200 = vpop.xlane.xlu0 %199
      %v201 = vsel %vm191, %v178, 0.0
      %202 = vadd.xlane.f32.xlu0 %v201
      %v203 = vpop.xlane.xlu0 %202
      %v204 = vsel %vm191, %v179, 0.0
      %205 = vadd.xlane.f32.xlu0 %v204
      %v206 = vpop.xlane.xlu0 %205
      %v207 = vsel %vm191, %v180, 0.0
      %208 = vadd.xlane.f32.xlu0 %v207
      %v209 = vpop.xlane.xlu0 %208
      %v210 = vsel %vm191, %v181, 0.0
      %211 = vadd.xlane.f32.xlu0 %v210
      %v212 = vpop.xlane.xlu0 %211
      %v213 = vsel %vm191, %v182, 0.0
      %214 = vadd.xlane.f32.xlu0 %v213
      %v215 = vpop.xlane.xlu0 %214
      %v216 = vsel %vm191, %v183, 0.0
      %217 = vadd.xlane.f32.xlu0 %v216
      %v218 = vpop.xlane.xlu0 %217
      %v219 = vsel %vm191, %v184, 0.0
      %220 = vadd.xlane.f32.xlu0 %v219
      %v221 = vpop.xlane.xlu0 %220
      %v222 = vsel %vm191, %v185, 0.0
      %223 = vadd.xlane.f32.xlu0 %v222
      %v224 = vpop.xlane.xlu0 %223
      %v225 = vsel %vm191, %v186, 0.0
      %226 = vadd.xlane.f32.xlu0 %v225
      %v227 = vpop.xlane.xlu0 %226
      %v228 = vsel %vm191, %v187, 0.0
      %229 = vadd.xlane.f32.xlu0 %v228
      %v230 = vpop.xlane.xlu0 %229
      %v231 = vsel %vm191, %v188, 0.0
      %232 = vadd.xlane.f32.xlu0 %v231
      %v233 = vpop.xlane.xlu0 %232
      %v234 = vsel %vm191, %v189, 0.0
      %235 = vadd.xlane.f32.xlu0 %v234
      %v236 = vpop.xlane.xlu0 %235
      %v237 = vsel %vm191, %v190, 0.0
      %238 = vadd.xlane.f32.xlu0 %v237
      %v239 = vpop.xlane.xlu0 %238
      %v240 = vrcp.pop 32.0
      %v241 = vmul.f32 %v194, %v240
      %v242 = vmul.f32 %v197, %v240
      %v243 = vmul.f32 %v200, %v240
      %v244 = vmul.f32 %v203, %v240
      %v245 = vmul.f32 %v206, %v240
      %v246 = vmul.f32 %v209, %v240
      %v247 = vmul.f32 %v212, %v240
      %v248 = vmul.f32 %v215, %v240
      %v249 = vmul.f32 %v218, %v240
      %v250 = vmul.f32 %v221, %v240
      %v251 = vmul.f32 %v224, %v240
      %v252 = vmul.f32 %v227, %v240
      %v253 = vmul.f32 %v230, %v240
      %v254 = vmul.f32 %v233, %v240
      %v255 = vmul.f32 %v236, %v240
      %v256 = vmul.f32 %v239, %v240
      %v257 = vsub.f32 %v175, %v241
      %v258 = vsub.f32 %v176, %v242
      %v259 = vsub.f32 %v177, %v243
      %v260 = vsub.f32 %v178, %v244
      %v261 = vsub.f32 %v179, %v245
      %v262 = vsub.f32 %v180, %v246
      %v263 = vsub.f32 %v181, %v247
      %v264 = vsub.f32 %v182, %v248
      %v265 = vsub.f32 %v183, %v249
      %v266 = vsub.f32 %v184, %v250
      %v267 = vsub.f32 %v185, %v251
      %v268 = vsub.f32 %v186, %v252
      %v269 = vsub.f32 %v187, %v253
      %v270 = vsub.f32 %v188, %v254
      %v271 = vsub.f32 %v189, %v255
      %v272 = vsub.f32 %v190, %v256
      %v273 = vmul.f32 %v257, %v257
      %v274 = vmul.f32 %v258, %v258
      %v275 = vmul.f32 %v259, %v259
      %v276 = vmul.f32 %v260, %v260
      %v277 = vmul.f32 %v261, %v261
      %v278 = vmul.f32 %v262, %v262
      %v279 = vmul.f32 %v263, %v263
      %v280 = vmul.f32 %v264, %v264
      %v281 = vmul.f32 %v265, %v265
      %v282 = vmul.f32 %v266, %v266
      %v283 = vmul.f32 %v267, %v267
      %v284 = vmul.f32 %v268, %v268
      %v285 = vmul.f32 %v269, %v269
      %v286 = vmul.f32 %v270, %v270
      %v287 = vmul.f32 %v271, %v271
      %v288 = vmul.f32 %v272, %v272
      %v289 = vsel %vm191, %v273, 0.0
      %290 = vadd.xlane.f32.xlu0 %v289
      %v291 = vpop.xlane.xlu0 %290
      %v292 = vsel %vm191, %v274, 0.0
      %293 = vadd.xlane.f32.xlu0 %v292
      %v294 = vpop.xlane.xlu0 %293
      %v295 = vsel %vm191, %v275, 0.0
      %296 = vadd.xlane.f32.xlu0 %v295
      %v297 = vpop.xlane.xlu0 %296
      %v298 = vsel %vm191, %v276, 0.0
      %299 = vadd.xlane.f32.xlu0 %v298
      %v300 = vpop.xlane.xlu0 %299
      %v301 = vsel %vm191, %v277, 0.0
      %302 = vadd.xlane.f32.xlu0 %v301
      %v303 = vpop.xlane.xlu0 %302
      %v304 = vsel %vm191, %v278, 0.0
      %305 = vadd.xlane.f32.xlu0 %v304
      %v306 = vpop.xlane.xlu0 %305
      %v307 = vsel %vm191, %v279, 0.0
      %308 = vadd.xlane.f32.xlu0 %v307
      %v309 = vpop.xlane.xlu0 %308
      %v310 = vsel %vm191, %v280, 0.0
      %311 = vadd.xlane.f32.xlu0 %v310
      %v312 = vpop.xlane.xlu0 %311
      %v313 = vsel %vm191, %v281, 0.0
      %314 = vadd.xlane.f32.xlu0 %v313
      %v315 = vpop.xlane.xlu0 %314
      %v316 = vsel %vm191, %v282, 0.0
      %317 = vadd.xlane.f32.xlu0 %v316
      %v318 = vpop.xlane.xlu0 %317
      %v319 = vsel %vm191, %v283, 0.0
      %320 = vadd.xlane.f32.xlu0 %v319
      %v321 = vpop.xlane.xlu0 %320
      %v322 = vsel %vm191, %v284, 0.0
      %323 = vadd.xlane.f32.xlu0 %v322
      %v324 = vpop.xlane.xlu0 %323
      %v325 = vsel %vm191, %v285, 0.0
      %326 = vadd.xlane.f32.xlu0 %v325
      %v327 = vpop.xlane.xlu0 %326
      %v328 = vsel %vm191, %v286, 0.0
      %329 = vadd.xlane.f32.xlu0 %v328
      %v330 = vpop.xlane.xlu0 %329
      %v331 = vsel %vm191, %v287, 0.0
      %332 = vadd.xlane.f32.xlu0 %v331
      %v333 = vpop.xlane.xlu0 %332
      %v334 = vsel %vm191, %v288, 0.0
      %335 = vadd.xlane.f32.xlu0 %v334
      %v336 = vpop.xlane.xlu0 %335
      %v337 = vmul.f32 %v291, %v240
      %v338 = vmul.f32 %v294, %v240
      %v339 = vmul.f32 %v297, %v240
      %v340 = vmul.f32 %v300, %v240
      %v341 = vmul.f32 %v303, %v240
      %v342 = vmul.f32 %v306, %v240
      %v343 = vmul.f32 %v309, %v240
      %v344 = vmul.f32 %v312, %v240
      %v345 = vmul.f32 %v315, %v240
      %v346 = vmul.f32 %v318, %v240
      %v347 = vmul.f32 %v321, %v240
      %v348 = vmul.f32 %v324, %v240
      %v349 = vmul.f32 %v327, %v240
      %v350 = vmul.f32 %v330, %v240
      %v351 = vmul.f32 %v333, %v240
      %v352 = vmul.f32 %v336, %v240
      %v353 = vadd.f32 %v337, 1e-05
      %v354 = vadd.f32 %v338, 1e-05
      %v355 = vadd.f32 %v339, 1e-05
      %v356 = vadd.f32 %v340, 1e-05
      %v357 = vadd.f32 %v341, 1e-05
      %v358 = vadd.f32 %v342, 1e-05
      %v359 = vadd.f32 %v343, 1e-05
      %v360 = vadd.f32 %v344, 1e-05
      %v361 = vadd.f32 %v345, 1e-05
      %v362 = vadd.f32 %v346, 1e-05
      %v363 = vadd.f32 %v347, 1e-05
      %v364 = vadd.f32 %v348, 1e-05
      %v365 = vadd.f32 %v349, 1e-05
      %v366 = vadd.f32 %v350, 1e-05
      %v367 = vadd.f32 %v351, 1e-05
      %v368 = vadd.f32 %v352, 1e-05
      %v369 = vrsqrt.pop %v353
      %v370 = vrsqrt.pop %v354
      %v371 = vrsqrt.pop %v355
      %v372 = vrsqrt.pop %v356
      %v373 = vrsqrt.pop %v357
      %v374 = vrsqrt.pop %v358
      %v375 = vrsqrt.pop %v359
      %v376 = vrsqrt.pop %v360
      %v377 = vrsqrt.pop %v361
      %v378 = vrsqrt.pop %v362
      %v379 = vrsqrt.pop %v363
      %v380 = vrsqrt.pop %v364
      %v381 = vrsqrt.pop %v365
      %v382 = vrsqrt.pop %v366
      %v383 = vrsqrt.pop %v367
      %v384 = vrsqrt.pop %v368
      %v385 = vmul.f32 %v257, %v369
      %v386 = vmul.f32 %v258, %v370
      %v387 = vmul.f32 %v259, %v371
      %v388 = vmul.f32 %v260, %v372
      %v389 = vmul.f32 %v261, %v373
      %v390 = vmul.f32 %v262, %v374
      %v391 = vmul.f32 %v263, %v375
      %v392 = vmul.f32 %v264, %v376
      %v393 = vmul.f32 %v265, %v377
      %v394 = vmul.f32 %v266, %v378
      %v395 = vmul.f32 %v267, %v379
      %v396 = vmul.f32 %v268, %v380
      %v397 = vmul.f32 %v269, %v381
      %v398 = vmul.f32 %v270, %v382
      %v399 = vmul.f32 %v271, %v383
      %v400 = vmul.f32 %v272, %v384
      %v401 = vpack.c.bf16 %v386, %v385
      %v402 = vpack.c.bf16 %v388, %v387
      %v403 = vpack.c.bf16 %v390, %v389
      %v404 = vpack.c.bf16 %v392, %v391
      %v405 = vpack.c.bf16 %v394, %v393
      %v406 = vpack.c.bf16 %v396, %v395
      %v407 = vpack.c.bf16 %v398, %v397
      %v408 = vpack.c.bf16 %v400, %v399
      %v409 = vld [vmem:[%s1] sm:$0xf]
      %v410 = vld [vmem:[%s1 + $0x4] sm:$0xf]
      %v411 = vld [vmem:[%s1 + $0x8] sm:$0xf]
      %v412 = vld [vmem:[%s1 + $0xc] sm:$0xf]
      %v413 = vld [vmem:[%s2] sm:$0x1]
      %v415 = vlaneseq
      %v416 = vshrl.u32 %v415, 7
      %v417 = vsub.s32 0, %v416
      %v418 = vrot.slane %v413, %v417
      %v424 = vunpack.c.l.b16 %v409
      %v425 = vunpack.c.l.b16 %v410
      %v426 = vunpack.c.l.b16 %v411
      %v427 = vunpack.c.l.b16 %v412
      %v428 = vpack.c.b16 %v425, %v424
      %v429 = vpack.c.b16 %v427, %v426
      %v433 = vsel %vm191, %v401, 0
      %v436 = vsel %vm191, %v402, 0
      %v439 = vsel %vm191, %v403, 0
      %v442 = vsel %vm191, %v404, 0
      %v445 = vsel %vm191, %v405, 0
      %v448 = vsel %vm191, %v406, 0
      %v451 = vsel %vm191, %v407, 0
      %v454 = vsel %vm191, %v408, 0
      %456 = vmatprep.subr.bf16.mxu0 0
      %457 = vmatpush1.bf16.msra.mxu0 %v428
      %458 = vmatprep.subr.bf16.mxu0 0
      %459 = vmatpush1.bf16.msra.mxu0 %v429
      %460 = vmatprep.subr.bf16.mxu0 0
      %461 = vmatpush1.bf16.msra.mxu0 0
      %462 = vmatprep.subr.bf16.mxu0 0
      %463 = vmatpush1.bf16.msra.mxu0 0
      %464 = vmatprep.subr.bf16.mxu0 0
      %465 = vmatpush1.bf16.msra.mxu0 0
      %466 = vmatprep.subr.bf16.mxu0 0
      %467 = vmatpush1.bf16.msra.mxu0 0
      %468 = vmatprep.subr.bf16.mxu0 0
      %469 = vmatpush1.bf16.msra.mxu0 0
      %470 = vmatprep.subr.bf16.mxu0 0
      %471 = vmatpush1.bf16.msra.mxu0 0
      %472 = vmatprep.subr.bf16.mxu0 0
      %473 = vmatpush1.bf16.msra.mxu0 0
      %474 = vmatprep.subr.bf16.mxu0 0
      %475 = vmatpush1.bf16.msra.mxu0 0
      %476 = vmatprep.subr.bf16.mxu0 0
      %477 = vmatpush1.bf16.msra.mxu0 0
      %478 = vmatprep.subr.bf16.mxu0 0
      %479 = vmatpush1.bf16.msra.mxu0 0
      %480 = vmatprep.subr.bf16.mxu0 0
      %481 = vmatpush1.bf16.msra.mxu0 0
      %482 = vmatprep.subr.bf16.mxu0 0
      %483 = vmatpush1.bf16.msra.mxu0 0
      %484 = vmatprep.subr.bf16.mxu0 0
      %485 = vmatpush1.bf16.msra.mxu0 0
      %486 = vmatprep.subr.bf16.mxu0 0
      %487 = vmatpush1.bf16.msra.mxu0 0
      %488 = vmatprep.mubr.bf16.mxu0 0
      %489 = vmatmul.mubr.bf16.gmra.mrb[0].mxu0 %v433
      %v490 = vpop.f32.mrb[0].mxu0
      %v491 = vadd.f32 %v418, %v490
      %v492 = vpop.f32.mrb[0].mxu0
      %v493 = vpop.f32.mrb[0].mxu0
      %v494 = vadd.f32 %v418, %v493
      %v495 = vpop.f32.mrb[0].mxu0
      %496 = vmatprep.mubr.bf16.mxu0 0
      %497 = vmatmul.mubr.bf16.gmra.mrb[0].mxu0 %v436
      %v498 = vpop.f32.mrb[0].mxu0
      %v499 = vadd.f32 %v418, %v498
      %v500 = vpop.f32.mrb[0].mxu0
      %v501 = vpop.f32.mrb[0].mxu0
      %v502 = vadd.f32 %v418, %v501
      %v503 = vpop.f32.mrb[0].mxu0
      %504 = vmatprep.mubr.bf16.mxu0 0
      %505 = vmatmul.mubr.bf16.gmra.mrb[0].mxu0 %v439
      %v506 = vpop.f32.mrb[0].mxu0
      %v507 = vadd.f32 %v418, %v506
      %v508 = vpop.f32.mrb[0].mxu0
      %v509 = vpop.f32.mrb[0].mxu0
      %v510 = vadd.f32 %v418, %v509
      %v511 = vpop.f32.mrb[0].mxu0
      %512 = vmatprep.mubr.bf16.mxu0 0
      %513 = vmatmul.mubr.bf16.gmra.mrb[0].mxu0 %v442
      %v514 = vpop.f32.mrb[0].mxu0
      %v515 = vadd.f32 %v418, %v514
      %v516 = vpop.f32.mrb[0].mxu0
      %v517 = vpop.f32.mrb[0].mxu0
      %v518 = vadd.f32 %v418, %v517
      %v519 = vpop.f32.mrb[0].mxu0
      %520 = vmatprep.mubr.bf16.mxu0 0
      %521 = vmatmul.mubr.bf16.gmra.mrb[0].mxu0 %v445
      %v522 = vpop.f32.mrb[0].mxu0
      %v523 = vadd.f32 %v418, %v522
      %v524 = vpop.f32.mrb[0].mxu0
      %v525 = vpop.f32.mrb[0].mxu0
      %v526 = vadd.f32 %v418, %v525
      %v527 = vpop.f32.mrb[0].mxu0
      %528 = vmatprep.mubr.bf16.mxu0 0
      %529 = vmatmul.mubr.bf16.gmra.mrb[0].mxu0 %v448
      %v530 = vpop.f32.mrb[0].mxu0
      %v531 = vadd.f32 %v418, %v530
      %v532 = vpop.f32.mrb[0].mxu0
      %v533 = vpop.f32.mrb[0].mxu0
      %v534 = vadd.f32 %v418, %v533
      %v535 = vpop.f32.mrb[0].mxu0
      %536 = vmatprep.mubr.bf16.mxu0 0
      %537 = vmatmul.mubr.bf16.gmra.mrb[0].mxu0 %v451
      %v538 = vpop.f32.mrb[0].mxu0
      %v539 = vadd.f32 %v418, %v538
      %v540 = vpop.f32.mrb[0].mxu0
      %v541 = vpop.f32.mrb[0].mxu0
      %v542 = vadd.f32 %v418, %v541
      %v543 = vpop.f32.mrb[0].mxu0
      %544 = vmatprep.mubr.bf16.mxu0 0
      %545 = vmatmul.mubr.bf16.gmra.mrb[0].mxu0 %v454
      %v546 = vpop.f32.mrb[0].mxu0
      %v547 = vadd.f32 %v418, %v546
      %v548 = vpop.f32.mrb[0].mxu0
      %v549 = vpop.f32.mrb[0].mxu0
      %v550 = vadd.f32 %v418, %v549
      %v551 = vpop.f32.mrb[0].mxu0
      %552 = vdwg.mxu0
      %v553 = vpack.c.bf16 %v494, %v491
      %v554 = vpack.c.bf16 %v502, %v499
      %v555 = vpack.c.bf16 %v510, %v507
      %v556 = vpack.c.bf16 %v518, %v515
      %v557 = vpack.c.bf16 %v526, %v523
      %v558 = vpack.c.bf16 %v534, %v531
      %v559 = vpack.c.bf16 %v542, %v539
      %v560 = vpack.c.bf16 %v550, %v547
      %v569 = vunpack.c.l.b16 %v553
      %v570 = vunpack.c.h.b16 %v553
      %v571 = vunpack.c.l.b16 %v554
      %v572 = vunpack.c.h.b16 %v554
      %v573 = vunpack.c.l.b16 %v555
      %v574 = vunpack.c.h.b16 %v555
      %v575 = vunpack.c.l.b16 %v556
      %v576 = vunpack.c.h.b16 %v556
      %v577 = vunpack.c.l.b16 %v557
      %v578 = vunpack.c.h.b16 %v557
      %v579 = vunpack.c.l.b16 %v558
      %v580 = vunpack.c.h.b16 %v558
      %v581 = vunpack.c.l.b16 %v559
      %v582 = vunpack.c.h.b16 %v559
      %v583 = vunpack.c.l.b16 %v560
      %v584 = vunpack.c.h.b16 %v560
      %v585 = vpack.c.b16 %v569, %v569
      %v586 = vpack.c.b16 %v570, %v570
      %v587 = vpack.c.b16 %v571, %v571
      %v588 = vpack.c.b16 %v572, %v572
      %v589 = vpack.c.b16 %v573, %v573
      %v590 = vpack.c.b16 %v574, %v574
      %v591 = vpack.c.b16 %v575, %v575
      %v592 = vpack.c.b16 %v576, %v576
      %v593 = vpack.c.b16 %v577, %v577
      %v594 = vpack.c.b16 %v578, %v578
      %v595 = vpack.c.b16 %v579, %v579
      %v596 = vpack.c.b16 %v580, %v580
      %v597 = vpack.c.b16 %v581, %v581
      %v598 = vpack.c.b16 %v582, %v582
      %v599 = vpack.c.b16 %v583, %v583
      %v600 = vpack.c.b16 %v584, %v584
      %vm617 = vcmask 519168
      %618 = vst.msk [vmem:[%s172] sm:$0xf] %vm617, %v585
      %619 = vst.msk [vmem:[%s172 + $0x4] sm:$0xf] %vm617, %v586
      %620 = vst.msk [vmem:[%s172 + $0x8] sm:$0xf] %vm617, %v587
      %621 = vst.msk [vmem:[%s172 + $0xc] sm:$0xf] %vm617, %v588
      %622 = vst.msk [vmem:[%s172 + $0x10] sm:$0xf] %vm617, %v589
      %623 = vst.msk [vmem:[%s172 + $0x14] sm:$0xf] %vm617, %v590
      %624 = vst.msk [vmem:[%s172 + $0x18] sm:$0xf] %vm617, %v591
      %625 = vst.msk [vmem:[%s172 + $0x1c] sm:$0xf] %vm617, %v592
      %626 = vst.msk [vmem:[%s172 + $0x20] sm:$0xf] %vm617, %v593
      %627 = vst.msk [vmem:[%s172 + $0x24] sm:$0xf] %vm617, %v594
      %628 = vst.msk [vmem:[%s172 + $0x28] sm:$0xf] %vm617, %v595
      %629 = vst.msk [vmem:[%s172 + $0x2c] sm:$0xf] %vm617, %v596
      %630 = vst.msk [vmem:[%s172 + $0x30] sm:$0xf] %vm617, %v597
      %631 = vst.msk [vmem:[%s172 + $0x34] sm:$0xf] %vm617, %v598
      %632 = vst.msk [vmem:[%s172 + $0x38] sm:$0xf] %vm617, %v599
      %633 = vst.msk [vmem:[%s172 + $0x3c] sm:$0xf] %vm617, %v600
      %s634 = smul.u32 16, %s14
      %p635 = scmp.lt.s32.totalorder %s634, 31
      %s636 = scalar_select %p635, %s634, 31
      %s637 = smul.addr %s636, 4
      %s638 = scalar_lea.vmem %s3, %s637
      // Predicated region
      $region33: #{tpu_custom_call.1} parent=31 // pred_check
        %p639 = pneg %p100
      $region34: #{tpu_custom_call.1} parent=31 // pred_check_branch
        %641 = sbr.rel (%p639) target = $region36
      $region35: #{tpu_custom_call.1} parent=31 // pred_region
        %s642 = smul.u32 16, %s14
      $region36: #{tpu_custom_call.1} parent=31 // pred_fallthru
        _
    $region32: #{tpu_custom_call.1} parent=5 // pred_fallthru
      _
    %p643 = scmp.le.s32.totalorder 2, %s9
    // Predicated region
    $region37: #{tpu_custom_call.1} parent=5 // pred_check
      %p644 = pneg %p643
    $region38: #{tpu_custom_call.1} parent=5 // pred_check_branch
      %646 = sbr.rel (%p644) target = $region40
    $region39: #{tpu_custom_call.1} parent=5 // pred_region
      %s647 = ssub.s32 %s9, 2
      // Predicated region
      $region41: #{tpu_custom_call.1} parent=39 // pred_check
        %p648 = pneg %p106
      $region42: #{tpu_custom_call.1} parent=39 // pred_check_branch
        %650 = sbr.rel (%p648) target = $region44
      $region43: #{tpu_custom_call.1} parent=39 // pred_region
        %s651 = smul.u32 16, %s15
        %p652 = scmp.lt.s32.totalorder %s651, 31
        %s653 = scalar_select %p652, %s651, 31
        %s654 = smul.addr %s653, 4
        %s655 = scalar_lea.vmem %s3, %s654
      $region44: #{tpu_custom_call.1} parent=39 // pred_fallthru
        _
    $region40: #{tpu_custom_call.1} parent=5 // pred_fallthru
      _
  $region6: #{tpu_custom_call.1} parent=0 // loop_footer
    %s13 = sadd.s32 1, %s9
  $region7: #{tpu_custom_call.1} parent=0 // loop_footer_branch
    %8 = sbr.rel target = $region3
  $region8: #{tpu_custom_call.1} parent=0 // loop_exit
    _

</llo_original>
